<compile_context>
chip_gen: v6e
topology: v6e:2x2x1
jax: 0.10.0
libtpu: 0.0.40
codegen_flags: <defaults>
</compile_context>

<pallas_src>
import jax
import jax.numpy as jnp
import numpy as np
from jax import lax
from jax.experimental import pallas as pl
from jax.experimental.pallas import tpu as pltpu

EPS = 1e-5
N = 2            # static batch size
L = 17           # input length: 16 * (17 - 5*(4-1)) == 32 == fc1 input size
K = 4            # conv kernel size
CONV_CH = [(1, 8), (8, 16), (16, 16), (16, 16), (16, 16)]
SLAB_COLS = 256


def _round8(n):
    return (n + 7) // 8 * 8


def _build_layout():
    layout = {}
    r = 0

    def add(name, rows, cols):
        nonlocal r
        layout[name] = (r, rows, cols)
        r += _round8(rows)            # keep every block 8-row aligned

    for i, (ci, co) in enumerate(CONV_CH, 1):
        add(f'conv{i}_w', K * ci, co)
        add(f'conv{i}_b', 1, co)
    add('fc1_w', 32, 256)
    add('fc1_b', 1, 256)
    add('fc2_w', 256, 128)
    add('fc2_b', 1, 128)
    add('fc3_w', 128, 128)
    add('fc3_b', 1, 128)
    return layout, r


LAYOUT, SLAB_ROWS = _build_layout()


# ----------------------------- Pallas kernel --------------------------------
def mid4conv_kernel(x_ref, w_ref, out_ref):
    def wslice(name):
        r0, nr, nc = LAYOUT[name]
        return w_ref[r0:r0 + nr, 0:nc]

    def conv_relu(a, l_in, w, b):
        # a: (N*l_in, Cin) with rows sample-major.  One batched im2col matmul.
        l_out = l_in - K + 1
        cols = []
        for n in range(N):
            base = n * l_in
            cols.append(jnp.concatenate(
                [a[base + k:base + k + l_out, :] for k in range(K)], axis=-1))
        big = jnp.concatenate(cols, axis=0)              # (N*l_out, K*Cin)
        out = jnp.dot(big, w, preferred_element_type=jnp.float32) + b
        return jnp.maximum(out, 0.0), l_out

    a = x_ref[...]                                       # (N*17, 1)
    l = L
    for i in range(1, 6):
        a, l = conv_relu(a, l, wslice(f'conv{i}_w'), wslice(f'conv{i}_b'))

    # a: (N*2, 16).  Flatten each sample's (t, c) block to a (1, 32) row in
    # t-major order (t*16 + c); the host-side fc1 row permutation matches.
    a5 = jnp.concatenate(
        [jnp.concatenate([a[2 * n + t:2 * n + t + 1, :] for t in range(2)],
                         axis=-1) for n in range(N)], axis=0)          # (N, 32)

    h = jnp.maximum(jnp.dot(a5, wslice('fc1_w'),
                            preferred_element_type=jnp.float32)
                    + wslice('fc1_b'), 0.0)              # (N, 256) — both heads
    h = jnp.maximum(jnp.dot(h, wslice('fc2_w'),
                            preferred_element_type=jnp.float32)
                    + wslice('fc2_b'), 0.0)              # (N, 128) — both heads
    out_ref[...] = (jnp.dot(h, wslice('fc3_w'),
                            preferred_element_type=jnp.float32)
                    + wslice('fc3_b'))                   # (N, 128): cols 0:2 / 2:3 used


# ------------------------------ parameters ----------------------------------
def init_params(key):
    keys = iter(jax.random.split(key, 64))

    def normal(shape, scale=0.1):
        return scale * jax.random.normal(next(keys), shape, jnp.float32)

    def bn(c):
        return dict(gamma=jax.random.uniform(next(keys), (c,), jnp.float32, 0.8, 1.2),
                    beta=normal((c,)),
                    mean=normal((c,)),
                    var=jax.random.uniform(next(keys), (c,), jnp.float32, 0.5, 1.5))

    P = {}
    for i, (ci, co) in enumerate(CONV_CH, 1):
        P[f'conv{i}_w'] = normal((co, ci, 4))
        P[f'conv{i}_b'] = normal((co,))
        P[f'bn{i}'] = bn(co)
    for h in ('1', '2'):
        P[f'fc1_{h}_w'] = normal((128, 32))
        P[f'fc1_{h}_b'] = normal((128,))
        P[f'bn6_{h}'] = bn(128)
        P[f'fc2_{h}_w'] = normal((64, 128))
        P[f'fc2_{h}_b'] = normal((64,))
        P[f'bn7_{h}'] = bn(64)
        d_out = 2 if h == '1' else 1
        P[f'fc3_{h}_w'] = normal((d_out, 64))
        P[f'fc3_{h}_b'] = normal((d_out,))
    return P


def pack_params(P):
    """Fold eval-mode BN into the preceding layers and pack everything into a
    single lane-dense (SLAB_ROWS, 256) f32 buffer (one weight DMA)."""
    def fold(w, b, bn):
        s = bn['gamma'] / jnp.sqrt(bn['var'] + EPS)
        wf = w * s.reshape((-1,) + (1,) * (w.ndim - 1))
        bf = (b - bn['mean']) * s + bn['beta']
        return wf, bf

    slab = jnp.zeros((SLAB_ROWS, SLAB_COLS), jnp.float32)

    def put(slab, name, val):
        r0, nr, nc = LAYOUT[name]
        assert val.shape == (nr, nc), (name, val.shape, (nr, nc))
        return slab.at[r0:r0 + nr, 0:nc].set(val.astype(jnp.float32))

    # Conv layers: PyTorch (Cout, Cin, K) -> (K*Cin, Cout) im2col weight.
    for i, (ci, co) in enumerate(CONV_CH, 1):
        wf, bf = fold(P[f'conv{i}_w'], P[f'conv{i}_b'], P[f'bn{i}'])
        slab = put(slab, f'conv{i}_w',
                   jnp.transpose(wf, (2, 1, 0)).reshape(K * ci, co))
        slab = put(slab, f'conv{i}_b', bf.reshape(1, co))

    # fc1 (both heads fused along the output axis).  PyTorch flattens x5 as
    # (N, 16, 2).view(-1, 32) -> column index c*2 + t; the kernel flattens
    # t-major (t*16 + c), so permute the rows accordingly.
    def fc1_rows(w):  # (128, 32) -> (32, 128) with row index t*16 + c
        return jnp.transpose(w.T.reshape(16, 2, 128), (1, 0, 2)).reshape(32, 128)

    w1a, b1a = fold(P['fc1_1_w'], P['fc1_1_b'], P['bn6_1'])
    w1b, b1b = fold(P['fc1_2_w'], P['fc1_2_b'], P['bn6_2'])
    slab = put(slab, 'fc1_w',
               jnp.concatenate([fc1_rows(w1a), fc1_rows(w1b)], axis=1))
    slab = put(slab, 'fc1_b', jnp.concatenate([b1a, b1b]).reshape(1, 256))

    # fc2 block-diagonal: head1 -> rows 0:128 / cols 0:64, head2 -> 128:256 / 64:128.
    w2a, b2a = fold(P['fc2_1_w'], P['fc2_1_b'], P['bn7_1'])
    w2b, b2b = fold(P['fc2_2_w'], P['fc2_2_b'], P['bn7_2'])
    fc2 = jnp.zeros((256, 128), jnp.float32)
    fc2 = fc2.at[0:128, 0:64].set(w2a.T)
    fc2 = fc2.at[128:256, 64:128].set(w2b.T)
    slab = put(slab, 'fc2_w', fc2)
    slab = put(slab, 'fc2_b', jnp.concatenate([b2a, b2b]).reshape(1, 128))

    # fc3 block-diagonal, lane-padded to 128: head1 -> cols 0:2, head2 -> col 2.
    fc3 = jnp.zeros((128, 128), jnp.float32)
    fc3 = fc3.at[0:64, 0:2].set(P['fc3_1_w'].T)
    fc3 = fc3.at[64:128, 2:3].set(P['fc3_2_w'].T)
    slab = put(slab, 'fc3_w', fc3)
    b3 = jnp.zeros((1, 128), jnp.float32)
    b3 = b3.at[0, 0:2].set(P['fc3_1_b'])
    b3 = b3.at[0, 2:3].set(P['fc3_2_b'])
    slab = put(slab, 'fc3_b', b3)
    return slab


# ------------------------------- wrapper -------------------------------------
@jax.jit
def mid4conv_forward(x, slab):
    # x: (N, 1, L) in PyTorch NCW layout.
    x_k = jnp.transpose(x, (0, 2, 1)).reshape(N * L, 1).astype(jnp.float32)
    flops = 2 * (28 * 4 * 8 + 22 * 32 * 16 + 16 * 64 * 16 + 10 * 64 * 16
                 + 4 * 64 * 16 + N * (32 * 256 + 256 * 128 + 128 * 128))
    bytes_accessed = 4 * (SLAB_ROWS * SLAB_COLS + N * L + N * 128)
    out = pl.pallas_call(
        mid4conv_kernel,
        out_shape=jax.ShapeDtypeStruct((N, 128), jnp.float32),
        in_specs=[pl.BlockSpec(memory_space=pltpu.MemorySpace.VMEM),
                  pl.BlockSpec(memory_space=pltpu.MemorySpace.VMEM)],
        out_specs=pl.BlockSpec(memory_space=pltpu.MemorySpace.VMEM),
        cost_estimate=pl.CostEstimate(flops=flops, transcendentals=0,
                                      bytes_accessed=bytes_accessed),
    )(x_k, slab)
    return out[:, 0:2], out[:, 2:3]


# --------------------------- pure-JAX reference ------------------------------
def reference_forward(x, P):
    def bn_apply(y, bn):
        g, b, m, v = bn['gamma'], bn['beta'], bn['mean'], bn['var']
        if y.ndim == 3:
            g, b, m, v = (t[None, :, None] for t in (g, b, m, v))
        else:
            g, b, m, v = (t[None, :] for t in (g, b, m, v))
        return g * (y - m) / jnp.sqrt(v + EPS) + b

    def conv(y, w, b):
        o = lax.conv_general_dilated(y, w, (1,), 'VALID',
                                     dimension_numbers=('NCH', 'OIH', 'NCH'))
        return o + b[None, :, None]

    a = x
    for i in range(1, 6):
        a = jax.nn.relu(bn_apply(conv(a, P[f'conv{i}_w'], P[f'conv{i}_b']),
                                 P[f'bn{i}']))
    a = a.reshape(a.shape[0], 32)                            # same as torch .view(-1, 32)
    outs = []
    for h in ('1', '2'):
        z = jax.nn.relu(bn_apply(a @ P[f'fc1_{h}_w'].T + P[f'fc1_{h}_b'], P[f'bn6_{h}']))
        z = jax.nn.relu(bn_apply(z @ P[f'fc2_{h}_w'].T + P[f'fc2_{h}_b'], P[f'bn7_{h}']))
        z = z @ P[f'fc3_{h}_w'].T + P[f'fc3_{h}_b']
        outs.append(z)
    return tuple(outs)


# --------------------------------- main ---------------------------------------
if __name__ == "__main__":
    key = jax.random.PRNGKey(0)
    pkey, xkey = jax.random.split(key)
    P = init_params(pkey)
    # L=17 is required by the module: 16 * (17 - 15) == 32 == fc input size.
    x = jax.random.normal(xkey, (N, 1, L), jnp.float32)

    # One-time weight prep (BN folding + packing); not on the steady-state path.
    slab = jax.block_until_ready(pack_params(P))

    out1, out2 = mid4conv_forward(x, slab)
    jax.block_until_ready((out1, out2))

    r1, r2 = reference_forward(x, P)
    np.testing.assert_allclose(np.asarray(out1), np.asarray(r1), rtol=1e-4, atol=1e-4)
    np.testing.assert_allclose(np.asarray(out2), np.asarray(r2), rtol=1e-4, atol=1e-4)
    assert out1.shape == (N, 2) and out2.shape == (N, 1)
    print("KERNEL_OK")
</pallas_src>

<mosaic_0001>
module attributes {stable_mosaic.version = 11 : i64} {
  func.func @mid4conv_kernel(%arg0: memref<34x1xf32, #tpu.memory_space<vmem>>, %arg1: memref<712x256xf32, #tpu.memory_space<vmem>>, %arg2: memref<2x128xf32, #tpu.memory_space<vmem>>) attributes {dimension_semantics = [], scalar_prefetch = 0 : i64, scratch_operands = 0 : i64, tpu.core_type = #tpu.core_type<tc>} {
    %c0 = arith.constant 0 : index
    %c0_0 = arith.constant 0 : index
    %0 = vector.load %arg0[%c0, %c0_0] : memref<34x1xf32, #tpu.memory_space<vmem>>, vector<34x1xf32>
    %c0_1 = arith.constant 0 : index
    %c0_2 = arith.constant 0 : index
    %1 = vector.load %arg1[%c0_1, %c0_2] : memref<712x256xf32, #tpu.memory_space<vmem>>, vector<4x8xf32>
    %c8 = arith.constant 8 : index
    %c0_3 = arith.constant 0 : index
    %2 = vector.load %arg1[%c8, %c0_3] : memref<712x256xf32, #tpu.memory_space<vmem>>, vector<1x8xf32>
    %3 = vector.extract_strided_slice %0 {offsets = [0, 0], sizes = [14, 1], strides = [1, 1]} : vector<34x1xf32> to vector<14x1xf32>
    %4 = vector.extract_strided_slice %0 {offsets = [1, 0], sizes = [14, 1], strides = [1, 1]} : vector<34x1xf32> to vector<14x1xf32>
    %5 = vector.extract_strided_slice %0 {offsets = [2, 0], sizes = [14, 1], strides = [1, 1]} : vector<34x1xf32> to vector<14x1xf32>
    %6 = vector.extract_strided_slice %0 {offsets = [3, 0], sizes = [14, 1], strides = [1, 1]} : vector<34x1xf32> to vector<14x1xf32>
    %7 = tpu.concatenate %3, %4, %5, %6 in 1 : vector<14x1xf32>, vector<14x1xf32>, vector<14x1xf32>, vector<14x1xf32> -> vector<14x4xf32>
    %8 = vector.extract_strided_slice %0 {offsets = [17, 0], sizes = [14, 1], strides = [1, 1]} : vector<34x1xf32> to vector<14x1xf32>
    %9 = vector.extract_strided_slice %0 {offsets = [18, 0], sizes = [14, 1], strides = [1, 1]} : vector<34x1xf32> to vector<14x1xf32>
    %10 = vector.extract_strided_slice %0 {offsets = [19, 0], sizes = [14, 1], strides = [1, 1]} : vector<34x1xf32> to vector<14x1xf32>
    %11 = vector.extract_strided_slice %0 {offsets = [20, 0], sizes = [14, 1], strides = [1, 1]} : vector<34x1xf32> to vector<14x1xf32>
    %12 = tpu.concatenate %8, %9, %10, %11 in 1 : vector<14x1xf32>, vector<14x1xf32>, vector<14x1xf32>, vector<14x1xf32> -> vector<14x4xf32>
    %13 = tpu.concatenate %7, %12 in 0 : vector<14x4xf32>, vector<14x4xf32> -> vector<28x4xf32>
    %cst = arith.constant dense<0.000000e+00> : vector<28x8xf32>
    %14 = tpu.matmul %13, %1, %cst {dimension_numbers = #tpu.dot_dimension_numbers<[1], [0], [0], [1], [0, 0, 1, 1], [], []>} : vector<28x4xf32>, vector<4x8xf32>, vector<28x8xf32> -> vector<28x8xf32>
    %15 = vector.broadcast %2 : vector<1x8xf32> to vector<28x8xf32>
    %16 = arith.addf %14, %15 : vector<28x8xf32>
    %cst_4 = arith.constant 0.000000e+00 : f32
    %17 = vector.broadcast %cst_4 : f32 to vector<28x8xf32>
    %18 = arith.maximumf %16, %17 : vector<28x8xf32>
    %c16 = arith.constant 16 : index
    %c0_5 = arith.constant 0 : index
    %19 = vector.load %arg1[%c16, %c0_5] : memref<712x256xf32, #tpu.memory_space<vmem>>, vector<32x16xf32>
    %c48 = arith.constant 48 : index
    %c0_6 = arith.constant 0 : index
    %20 = vector.load %arg1[%c48, %c0_6] : memref<712x256xf32, #tpu.memory_space<vmem>>, vector<1x16xf32>
    %21 = vector.extract_strided_slice %18 {offsets = [0, 0], sizes = [11, 8], strides = [1, 1]} : vector<28x8xf32> to vector<11x8xf32>
    %22 = vector.extract_strided_slice %18 {offsets = [1, 0], sizes = [11, 8], strides = [1, 1]} : vector<28x8xf32> to vector<11x8xf32>
    %23 = vector.extract_strided_slice %18 {offsets = [2, 0], sizes = [11, 8], strides = [1, 1]} : vector<28x8xf32> to vector<11x8xf32>
    %24 = vector.extract_strided_slice %18 {offsets = [3, 0], sizes = [11, 8], strides = [1, 1]} : vector<28x8xf32> to vector<11x8xf32>
    %25 = tpu.concatenate %21, %22, %23, %24 in 1 : vector<11x8xf32>, vector<11x8xf32>, vector<11x8xf32>, vector<11x8xf32> -> vector<11x32xf32>
    %26 = vector.extract_strided_slice %18 {offsets = [14, 0], sizes = [11, 8], strides = [1, 1]} : vector<28x8xf32> to vector<11x8xf32>
    %27 = vector.extract_strided_slice %18 {offsets = [15, 0], sizes = [11, 8], strides = [1, 1]} : vector<28x8xf32> to vector<11x8xf32>
    %28 = vector.extract_strided_slice %18 {offsets = [16, 0], sizes = [11, 8], strides = [1, 1]} : vector<28x8xf32> to vector<11x8xf32>
    %29 = vector.extract_strided_slice %18 {offsets = [17, 0], sizes = [11, 8], strides = [1, 1]} : vector<28x8xf32> to vector<11x8xf32>
    %30 = tpu.concatenate %26, %27, %28, %29 in 1 : vector<11x8xf32>, vector<11x8xf32>, vector<11x8xf32>, vector<11x8xf32> -> vector<11x32xf32>
    %31 = tpu.concatenate %25, %30 in 0 : vector<11x32xf32>, vector<11x32xf32> -> vector<22x32xf32>
    %cst_7 = arith.constant dense<0.000000e+00> : vector<22x16xf32>
    %32 = tpu.matmul %31, %19, %cst_7 {dimension_numbers = #tpu.dot_dimension_numbers<[1], [0], [0], [1], [0, 0, 1, 1], [], []>} : vector<22x32xf32>, vector<32x16xf32>, vector<22x16xf32> -> vector<22x16xf32>
    %33 = vector.broadcast %20 : vector<1x16xf32> to vector<22x16xf32>
    %34 = arith.addf %32, %33 : vector<22x16xf32>
    %cst_8 = arith.constant 0.000000e+00 : f32
    %35 = vector.broadcast %cst_8 : f32 to vector<22x16xf32>
    %36 = arith.maximumf %34, %35 : vector<22x16xf32>
    %c56 = arith.constant 56 : index
    %c0_9 = arith.constant 0 : index
    %37 = vector.load %arg1[%c56, %c0_9] : memref<712x256xf32, #tpu.memory_space<vmem>>, vector<64x16xf32>
    %c120 = arith.constant 120 : index
    %c0_10 = arith.constant 0 : index
    %38 = vector.load %arg1[%c120, %c0_10] : memref<712x256xf32, #tpu.memory_space<vmem>>, vector<1x16xf32>
    %39 = vector.extract_strided_slice %36 {offsets = [0, 0], sizes = [8, 16], strides = [1, 1]} : vector<22x16xf32> to vector<8x16xf32>
    %40 = vector.extract_strided_slice %36 {offsets = [1, 0], sizes = [8, 16], strides = [1, 1]} : vector<22x16xf32> to vector<8x16xf32>
    %41 = vector.extract_strided_slice %36 {offsets = [2, 0], sizes = [8, 16], strides = [1, 1]} : vector<22x16xf32> to vector<8x16xf32>
    %42 = vector.extract_strided_slice %36 {offsets = [3, 0], sizes = [8, 16], strides = [1, 1]} : vector<22x16xf32> to vector<8x16xf32>
    %43 = tpu.concatenate %39, %40, %41, %42 in 1 : vector<8x16xf32>, vector<8x16xf32>, vector<8x16xf32>, vector<8x16xf32> -> vector<8x64xf32>
    %44 = vector.extract_strided_slice %36 {offsets = [11, 0], sizes = [8, 16], strides = [1, 1]} : vector<22x16xf32> to vector<8x16xf32>
    %45 = vector.extract_strided_slice %36 {offsets = [12, 0], sizes = [8, 16], strides = [1, 1]} : vector<22x16xf32> to vector<8x16xf32>
    %46 = vector.extract_strided_slice %36 {offsets = [13, 0], sizes = [8, 16], strides = [1, 1]} : vector<22x16xf32> to vector<8x16xf32>
    %47 = vector.extract_strided_slice %36 {offsets = [14, 0], sizes = [8, 16], strides = [1, 1]} : vector<22x16xf32> to vector<8x16xf32>
    %48 = tpu.concatenate %44, %45, %46, %47 in 1 : vector<8x16xf32>, vector<8x16xf32>, vector<8x16xf32>, vector<8x16xf32> -> vector<8x64xf32>
    %49 = tpu.concatenate %43, %48 in 0 : vector<8x64xf32>, vector<8x64xf32> -> vector<16x64xf32>
    %cst_11 = arith.constant dense<0.000000e+00> : vector<16x16xf32>
    %50 = tpu.matmul %49, %37, %cst_11 {dimension_numbers = #tpu.dot_dimension_numbers<[1], [0], [0], [1], [0, 0, 1, 1], [], []>} : vector<16x64xf32>, vector<64x16xf32>, vector<16x16xf32> -> vector<16x16xf32>
    %51 = vector.broadcast %38 : vector<1x16xf32> to vector<16x16xf32>
    %52 = arith.addf %50, %51 : vector<16x16xf32>
    %cst_12 = arith.constant 0.000000e+00 : f32
    %53 = vector.broadcast %cst_12 : f32 to vector<16x16xf32>
    %54 = arith.maximumf %52, %53 : vector<16x16xf32>
    %c128 = arith.constant 128 : index
    %c0_13 = arith.constant 0 : index
    %55 = vector.load %arg1[%c128, %c0_13] : memref<712x256xf32, #tpu.memory_space<vmem>>, vector<64x16xf32>
    %c192 = arith.constant 192 : index
    %c0_14 = arith.constant 0 : index
    %56 = vector.load %arg1[%c192, %c0_14] : memref<712x256xf32, #tpu.memory_space<vmem>>, vector<1x16xf32>
    %57 = vector.extract_strided_slice %54 {offsets = [0, 0], sizes = [5, 16], strides = [1, 1]} : vector<16x16xf32> to vector<5x16xf32>
    %58 = vector.extract_strided_slice %54 {offsets = [1, 0], sizes = [5, 16], strides = [1, 1]} : vector<16x16xf32> to vector<5x16xf32>
    %59 = vector.extract_strided_slice %54 {offsets = [2, 0], sizes = [5, 16], strides = [1, 1]} : vector<16x16xf32> to vector<5x16xf32>
    %60 = vector.extract_strided_slice %54 {offsets = [3, 0], sizes = [5, 16], strides = [1, 1]} : vector<16x16xf32> to vector<5x16xf32>
    %61 = tpu.concatenate %57, %58, %59, %60 in 1 : vector<5x16xf32>, vector<5x16xf32>, vector<5x16xf32>, vector<5x16xf32> -> vector<5x64xf32>
    %62 = vector.extract_strided_slice %54 {offsets = [8, 0], sizes = [5, 16], strides = [1, 1]} : vector<16x16xf32> to vector<5x16xf32>
    %63 = vector.extract_strided_slice %54 {offsets = [9, 0], sizes = [5, 16], strides = [1, 1]} : vector<16x16xf32> to vector<5x16xf32>
    %64 = vector.extract_strided_slice %54 {offsets = [10, 0], sizes = [5, 16], strides = [1, 1]} : vector<16x16xf32> to vector<5x16xf32>
    %65 = vector.extract_strided_slice %54 {offsets = [11, 0], sizes = [5, 16], strides = [1, 1]} : vector<16x16xf32> to vector<5x16xf32>
    %66 = tpu.concatenate %62, %63, %64, %65 in 1 : vector<5x16xf32>, vector<5x16xf32>, vector<5x16xf32>, vector<5x16xf32> -> vector<5x64xf32>
    %67 = tpu.concatenate %61, %66 in 0 : vector<5x64xf32>, vector<5x64xf32> -> vector<10x64xf32>
    %cst_15 = arith.constant dense<0.000000e+00> : vector<10x16xf32>
    %68 = tpu.matmul %67, %55, %cst_15 {dimension_numbers = #tpu.dot_dimension_numbers<[1], [0], [0], [1], [0, 0, 1, 1], [], []>} : vector<10x64xf32>, vector<64x16xf32>, vector<10x16xf32> -> vector<10x16xf32>
    %69 = vector.broadcast %56 : vector<1x16xf32> to vector<10x16xf32>
    %70 = arith.addf %68, %69 : vector<10x16xf32>
    %cst_16 = arith.constant 0.000000e+00 : f32
    %71 = vector.broadcast %cst_16 : f32 to vector<10x16xf32>
    %72 = arith.maximumf %70, %71 : vector<10x16xf32>
    %c200 = arith.constant 200 : index
    %c0_17 = arith.constant 0 : index
    %73 = vector.load %arg1[%c200, %c0_17] : memref<712x256xf32, #tpu.memory_space<vmem>>, vector<64x16xf32>
    %c264 = arith.constant 264 : index
    %c0_18 = arith.constant 0 : index
    %74 = vector.load %arg1[%c264, %c0_18] : memref<712x256xf32, #tpu.memory_space<vmem>>, vector<1x16xf32>
    %75 = vector.extract_strided_slice %72 {offsets = [0, 0], sizes = [2, 16], strides = [1, 1]} : vector<10x16xf32> to vector<2x16xf32>
    %76 = vector.extract_strided_slice %72 {offsets = [1, 0], sizes = [2, 16], strides = [1, 1]} : vector<10x16xf32> to vector<2x16xf32>
    %77 = vector.extract_strided_slice %72 {offsets = [2, 0], sizes = [2, 16], strides = [1, 1]} : vector<10x16xf32> to vector<2x16xf32>
    %78 = vector.extract_strided_slice %72 {offsets = [3, 0], sizes = [2, 16], strides = [1, 1]} : vector<10x16xf32> to vector<2x16xf32>
    %79 = tpu.concatenate %75, %76, %77, %78 in 1 : vector<2x16xf32>, vector<2x16xf32>, vector<2x16xf32>, vector<2x16xf32> -> vector<2x64xf32>
    %80 = vector.extract_strided_slice %72 {offsets = [5, 0], sizes = [2, 16], strides = [1, 1]} : vector<10x16xf32> to vector<2x16xf32>
    %81 = vector.extract_strided_slice %72 {offsets = [6, 0], sizes = [2, 16], strides = [1, 1]} : vector<10x16xf32> to vector<2x16xf32>
    %82 = vector.extract_strided_slice %72 {offsets = [7, 0], sizes = [2, 16], strides = [1, 1]} : vector<10x16xf32> to vector<2x16xf32>
    %83 = vector.extract_strided_slice %72 {offsets = [8, 0], sizes = [2, 16], strides = [1, 1]} : vector<10x16xf32> to vector<2x16xf32>
    %84 = tpu.concatenate %80, %81, %82, %83 in 1 : vector<2x16xf32>, vector<2x16xf32>, vector<2x16xf32>, vector<2x16xf32> -> vector<2x64xf32>
    %85 = tpu.concatenate %79, %84 in 0 : vector<2x64xf32>, vector<2x64xf32> -> vector<4x64xf32>
    %cst_19 = arith.constant dense<0.000000e+00> : vector<4x16xf32>
    %86 = tpu.matmul %85, %73, %cst_19 {dimension_numbers = #tpu.dot_dimension_numbers<[1], [0], [0], [1], [0, 0, 1, 1], [], []>} : vector<4x64xf32>, vector<64x16xf32>, vector<4x16xf32> -> vector<4x16xf32>
    %87 = vector.broadcast %74 : vector<1x16xf32> to vector<4x16xf32>
    %88 = arith.addf %86, %87 : vector<4x16xf32>
    %cst_20 = arith.constant 0.000000e+00 : f32
    %89 = vector.broadcast %cst_20 : f32 to vector<4x16xf32>
    %90 = arith.maximumf %88, %89 : vector<4x16xf32>
    %91 = vector.extract_strided_slice %90 {offsets = [0, 0], sizes = [1, 16], strides = [1, 1]} : vector<4x16xf32> to vector<1x16xf32>
    %92 = vector.extract_strided_slice %90 {offsets = [1, 0], sizes = [1, 16], strides = [1, 1]} : vector<4x16xf32> to vector<1x16xf32>
    %93 = tpu.concatenate %91, %92 in 1 : vector<1x16xf32>, vector<1x16xf32> -> vector<1x32xf32>
    %94 = vector.extract_strided_slice %90 {offsets = [2, 0], sizes = [1, 16], strides = [1, 1]} : vector<4x16xf32> to vector<1x16xf32>
    %95 = vector.extract_strided_slice %90 {offsets = [3, 0], sizes = [1, 16], strides = [1, 1]} : vector<4x16xf32> to vector<1x16xf32>
    %96 = tpu.concatenate %94, %95 in 1 : vector<1x16xf32>, vector<1x16xf32> -> vector<1x32xf32>
    %97 = tpu.concatenate %93, %96 in 0 : vector<1x32xf32>, vector<1x32xf32> -> vector<2x32xf32>
    %c272 = arith.constant 272 : index
    %c0_21 = arith.constant 0 : index
    %98 = vector.load %arg1[%c272, %c0_21] : memref<712x256xf32, #tpu.memory_space<vmem>>, vector<32x256xf32>
    %cst_22 = arith.constant dense<0.000000e+00> : vector<2x256xf32>
    %99 = tpu.matmul %97, %98, %cst_22 {dimension_numbers = #tpu.dot_dimension_numbers<[1], [0], [0], [1], [0, 0, 1, 1], [], []>} : vector<2x32xf32>, vector<32x256xf32>, vector<2x256xf32> -> vector<2x256xf32>
    %c304 = arith.constant 304 : index
    %c0_23 = arith.constant 0 : index
    %100 = vector.load %arg1[%c304, %c0_23] : memref<712x256xf32, #tpu.memory_space<vmem>>, vector<1x256xf32>
    %101 = vector.broadcast %100 : vector<1x256xf32> to vector<2x256xf32>
    %102 = arith.addf %99, %101 : vector<2x256xf32>
    %cst_24 = arith.constant 0.000000e+00 : f32
    %103 = vector.broadcast %cst_24 : f32 to vector<2x256xf32>
    %104 = arith.maximumf %102, %103 : vector<2x256xf32>
    %c312 = arith.constant 312 : index
    %c0_25 = arith.constant 0 : index
    %105 = vector.load %arg1[%c312, %c0_25] : memref<712x256xf32, #tpu.memory_space<vmem>>, vector<256x128xf32>
    %cst_26 = arith.constant dense<0.000000e+00> : vector<2x128xf32>
    %106 = tpu.matmul %104, %105, %cst_26 {dimension_numbers = #tpu.dot_dimension_numbers<[1], [0], [0], [1], [0, 0, 1, 1], [], []>} : vector<2x256xf32>, vector<256x128xf32>, vector<2x128xf32> -> vector<2x128xf32>
    %c568 = arith.constant 568 : index
    %c0_27 = arith.constant 0 : index
    %107 = vector.load %arg1[%c568, %c0_27] : memref<712x256xf32, #tpu.memory_space<vmem>>, vector<1x128xf32>
    %108 = vector.broadcast %107 : vector<1x128xf32> to vector<2x128xf32>
    %109 = arith.addf %106, %108 : vector<2x128xf32>
    %cst_28 = arith.constant 0.000000e+00 : f32
    %110 = vector.broadcast %cst_28 : f32 to vector<2x128xf32>
    %111 = arith.maximumf %109, %110 : vector<2x128xf32>
    %c576 = arith.constant 576 : index
    %c0_29 = arith.constant 0 : index
    %112 = vector.load %arg1[%c576, %c0_29] : memref<712x256xf32, #tpu.memory_space<vmem>>, vector<128x128xf32>
    %cst_30 = arith.constant dense<0.000000e+00> : vector<2x128xf32>
    %113 = tpu.matmul %111, %112, %cst_30 {dimension_numbers = #tpu.dot_dimension_numbers<[1], [0], [0], [1], [0, 0, 1, 1], [], []>} : vector<2x128xf32>, vector<128x128xf32>, vector<2x128xf32> -> vector<2x128xf32>
    %c704 = arith.constant 704 : index
    %c0_31 = arith.constant 0 : index
    %114 = vector.load %arg1[%c704, %c0_31] : memref<712x256xf32, #tpu.memory_space<vmem>>, vector<1x128xf32>
    %115 = vector.broadcast %114 : vector<1x128xf32> to vector<2x128xf32>
    %116 = arith.addf %113, %115 : vector<2x128xf32>
    %c0_32 = arith.constant 0 : index
    %c0_33 = arith.constant 0 : index
    %117 = vector.load %arg2[%c0_32, %c0_33] : memref<2x128xf32, #tpu.memory_space<vmem>>, vector<2x128xf32>
    tpu.vector_store %arg2[%c0_32, %c0_33], %116 {strides = array<i32>} : memref<2x128xf32, #tpu.memory_space<vmem>>, vector<2x128xf32>,
    return
  }
}

</mosaic_0001>

<llo_original>
// kernel: mid4conv_forward.1
$region0: #{mid4conv_forward.1}
  #allocation0 [shape = 'u32[]', space=smem, size = 0x4, offset = 0x4, fixed_abs, tag = 'smem constant byte address 0x4 - core index']
  #allocation1 [shape = 'u32[144,128]{1,0:T(1,128)}', space=vmem, size = 0x12000, scoped, tag = 'internal scratch']
  %s0 = inlined_call_operand.vmem [shape: f32[34,1], index: 0, kind: input, shape index: {}]
  %s1 = inlined_call_operand.hbm [shape: f32[712,256], index: 1, kind: input, shape index: {}]
  %s2 = inlined_call_operand.vmem [shape: f32[2,128], index: 2, kind: output, shape index: {}]
  %s3 = sld [smem:[#allocation0]]
  $region22: #{mid4conv_forward.1} parent=0
    _
  %s5 = ssub.s32 1, %s3
  %s6 = scalar_select 0, %s5, %s3
  $region1: #{mid4conv_forward.1} parent=0
    #allocation2 [shape = 'u8[729088]{0}', space=vmem, size = 0xb2000, scoped, tag = 'input window, operand 1, single buffered']
    #allocation3 [shape = 's32[1]{0}', space=sflag, size = 0x4, scoped, tag = 'scoped memory for mid4conv_forward.1']
    %7 = vsyncpa [#allocation3], 0
    // Predicated region
    $region2: #{mid4conv_forward.1} parent=1 // pred_check
      _
    $region3: #{mid4conv_forward.1} parent=1 // pred_check_branch
      %9 = sbr.rel (0) target = $region5
    $region4: #{mid4conv_forward.1} parent=1 // pred_region
      _
    $region5: #{mid4conv_forward.1} parent=1 // pred_fallthru
      _
    // Predicated region
    $region6: #{mid4conv_forward.1} parent=1 // pred_check
      _
    $region7: #{mid4conv_forward.1} parent=1 // pred_check_branch
      %11 = sbr.rel (0) target = $region9
    $region8: #{mid4conv_forward.1} parent=1 // pred_region
      %s13 = ssub.s32 22784, 22784
      %14 = vsyncadd [#allocation3], %s13
      %s15 = sshll.u32 [#allocation2], 4
      %s16 = int_to_ptr.vmem [resolvable:$true] %s15
      %21 = dma.hbm_to_vmem [thread:$0]  %s1, 22784, %s16, [#allocation3], 256, 256, 16
    $region9: #{mid4conv_forward.1} parent=1 // pred_fallthru
      _
    // Predicated region
    $region10: #{mid4conv_forward.1} parent=1 // pred_check
      _
    $region11: #{mid4conv_forward.1} parent=1 // pred_check_branch
      %23 = sbr.rel (0) target = $region13
    $region12: #{mid4conv_forward.1} parent=1 // pred_region
      %24 = dma.done [#allocation3], 22784
    $region13: #{mid4conv_forward.1} parent=1 // pred_fallthru
      _
    %v25 = vld [vmem:[%s0] sm:$0xff]
    %v26 = vld [vmem:[%s0 + $0x8] sm:$0xff]
    %v27 = vld [vmem:[%s0 + $0x10] sm:$0xff]
    %v28 = vld [vmem:[%s0 + $0x18] sm:$0xff]
    %v29 = vld [vmem:[%s0 + $0x20] sm:$0x3]
    %v30 = vld [vmem:[#allocation2] sm:$0xf]
    %v31 = vld [vmem:[#allocation2 + $0x10] ss:$0 sm:$0xff]
    %vm34 = vcmask 1046528
    %v35 = vrot.slane %v25, 1
    %v36 = vrot.slane %v26, 1
    %v37 = vsel %vm34, %v35, %v36
    %38 = vrot.lane.b32.xlu0 %v37, 1
    %v39 = vpop.permute.xlu0 %38
    %40 = vrot.lane.b32.xlu0 %v36, 1
    %v41 = vpop.permute.xlu0 %40
    %vm44 = vcmask 1045504
    %v45 = vrot.slane %v25, 2
    %v46 = vrot.slane %v26, 2
    %v47 = vsel %vm44, %v45, %v46
    %48 = vrot.lane.b32.xlu0 %v47, 2
    %v49 = vpop.permute.xlu0 %48
    %50 = vrot.lane.b32.xlu0 %v46, 2
    %v51 = vpop.permute.xlu0 %50
    %vm55 = vcmask 1044480
    %v56 = vrot.slane %v25, 3
    %v57 = vrot.slane %v26, 3
    %v58 = vsel %vm55, %v56, %v57
    %v59 = vrot.slane %v27, 3
    %v60 = vsel %vm55, %v57, %v59
    %61 = vrot.lane.b32.xlu0 %v58, 3
    %v62 = vpop.permute.xlu0 %61
    %63 = vrot.lane.b32.xlu0 %v60, 3
    %v64 = vpop.permute.xlu0 %63
    %vm67 = vcmask 7168
    %v68 = vsel %vm67, %v25, %v39
    %v69 = vsel %vm67, %v26, %v41
    %vm70 = vcmask 15360
    %v71 = vsel %vm70, %v68, %v49
    %v72 = vsel %vm70, %v69, %v51
    %vm73 = vcmask 23552
    %v74 = vsel %vm73, %v71, %v62
    %v75 = vsel %vm73, %v72, %v64
    %v77 = vrot.slane %v27, 1
    %v78 = vrot.slane %v28, 1
    %v79 = vsel %vm34, %v77, %v78
    %80 = vrot.lane.b32.xlu0 %v79, 1
    %v81 = vpop.permute.xlu0 %80
    %82 = vrot.lane.b32.xlu0 %v78, 1
    %v83 = vpop.permute.xlu0 %82
    %v87 = vrot.slane %v27, 2
    %v88 = vrot.slane %v28, 2
    %v89 = vsel %vm44, %v87, %v88
    %v90 = vrot.slane %v29, 2
    %v91 = vsel %vm44, %v88, %v90
    %92 = vrot.lane.b32.xlu0 %v89, 2
    %v93 = vpop.permute.xlu0 %92
    %94 = vrot.lane.b32.xlu0 %v91, 2
    %v95 = vpop.permute.xlu0 %94
    %v98 = vrot.slane %v28, 3
    %v99 = vsel %vm55, %v59, %v98
    %v100 = vrot.slane %v29, 3
    %v101 = vsel %vm55, %v98, %v100
    %102 = vrot.lane.b32.xlu0 %v99, 3
    %v103 = vpop.permute.xlu0 %102
    %104 = vrot.lane.b32.xlu0 %v101, 3
    %v105 = vpop.permute.xlu0 %104
    %v108 = vsel %vm67, %v27, %v81
    %v109 = vsel %vm67, %v28, %v83
    %v110 = vsel %vm70, %v108, %v93
    %v111 = vsel %vm70, %v109, %v95
    %v112 = vsel %vm73, %v110, %v103
    %v113 = vsel %vm73, %v111, %v105
    %v116 = vrot.slane %v112, 3
    %v117 = vrot.slane %v113, 3
    %v118 = vsel %vm55, %v116, %v117
    %v120 = vsel %vm44, %v75, %v116
    %vm121 = vcmask 31744
    %v123 = vsel %vm121, %v74, 0
    %v126 = vsel %vm121, %v120, 0
    %v128 = vsel %vm121, %v118, 0
    %v130 = vsel %vm121, %v117, 0
    %vm132 = vcmask 1043456
    %v134 = vsel %vm132, %v30, 0
    %136 = vmatprep.subr.mxu0 0.0
    %137 = vmatpush1.msra.mxu0 0.0
    %138 = vmatprep.subr.mxu0 0.0
    %139 = vmatpush1.msra.mxu0 0.0
    %140 = vmatprep.subr.mxu0 0.0
    %141 = vmatpush1.msra.mxu0 0.0
    %142 = vmatprep.subr.mxu0 0.0
    %143 = vmatpush1.msra.mxu0 0.0
    %144 = vmatprep.subr.mxu0 0.0
    %145 = vmatpush1.msra.mxu0 0.0
    %146 = vmatprep.subr.mxu0 0.0
    %147 = vmatpush1.msra.mxu0 0.0
    %148 = vmatprep.subr.mxu0 0.0
    %149 = vmatpush1.msra.mxu0 0.0
    %150 = vmatprep.subr.mxu0 0.0
    %151 = vmatpush1.msra.mxu0 0.0
    %152 = vmatprep.subr.mxu0 0.0
    %153 = vmatpush1.msra.mxu0 0.0
    %154 = vmatprep.subr.mxu0 0.0
    %155 = vmatpush1.msra.mxu0 0.0
    %156 = vmatprep.subr.mxu0 0.0
    %157 = vmatpush1.msra.mxu0 0.0
    %158 = vmatprep.subr.mxu0 0.0
    %159 = vmatpush1.msra.mxu0 0.0
    %160 = vmatprep.subr.mxu0 0.0
    %161 = vmatpush1.msra.mxu0 0.0
    %162 = vmatprep.subr.mxu0 0.0
    %163 = vmatpush1.msra.mxu0 0.0
    %164 = vmatprep.subr.mxu0 0.0
    %165 = vmatpush1.msra.mxu0 0.0
    %166 = vmatprep.subr.mxu0 0.0
    %167 = vmatpush1.msra.mxu0 %v134
    %168 = vmatprep.subr.mxu0 0.0
    %169 = vmatpush2.msra.mxu0 0.0
    %170 = vmatprep.subr.mxu0 0.0
    %171 = vmatpush2.msra.mxu0 0.0
    %172 = vmatprep.subr.mxu0 0.0
    %173 = vmatpush2.msra.mxu0 0.0
    %174 = vmatprep.subr.mxu0 0.0
    %175 = vmatpush2.msra.mxu0 0.0
    %176 = vmatprep.subr.mxu0 0.0
    %177 = vmatpush2.msra.mxu0 0.0
    %178 = vmatprep.subr.mxu0 0.0
    %179 = vmatpush2.msra.mxu0 0.0
    %180 = vmatprep.subr.mxu0 0.0
    %181 = vmatpush2.msra.mxu0 0.0
    %182 = vmatprep.subr.mxu0 0.0
    %183 = vmatpush2.msra.mxu0 0.0
    %184 = vmatprep.subr.mxu0 0.0
    %185 = vmatpush2.msra.mxu0 0.0
    %186 = vmatprep.subr.mxu0 0.0
    %187 = vmatpush2.msra.mxu0 0.0
    %188 = vmatprep.subr.mxu0 0.0
    %189 = vmatpush2.msra.mxu0 0.0
    %190 = vmatprep.subr.mxu0 0.0
    %191 = vmatpush2.msra.mxu0 0.0
    %192 = vmatprep.subr.mxu0 0.0
    %193 = vmatpush2.msra.mxu0 0.0
    %194 = vmatprep.subr.mxu0 0.0
    %195 = vmatpush2.msra.mxu0 0.0
    %196 = vmatprep.subr.mxu0 0.0
    %197 = vmatpush2.msra.mxu0 0.0
    %198 = vmatprep.subr.mxu0 0.0
    %199 = vmatpush2.msra.mxu0 0.0
    %200 = vmatprep.mubr.f32.mxu0 0.0
    %201 = vmatmul.mubr.f32.gmra.mxu0 %v123
    %v202 = vpop.f32.mrf.mxu0
    %v203 = vadd.f32 %v31, %v202
    %v204 = vpop.f32.mrf.mxu0
    %205 = vmatprep.mubr.f32.mxu0 0.0
    %206 = vmatmul.mubr.f32.gmra.mxu0 %v126
    %v207 = vpop.f32.mrf.mxu0
    %v208 = vadd.f32 %v31, %v207
    %v209 = vpop.f32.mrf.mxu0
    %210 = vmatprep.mubr.f32.mxu0 0.0
    %211 = vmatmul.mubr.f32.gmra.mxu0 %v128
    %v212 = vpop.f32.mrf.mxu0
    %v213 = vadd.f32 %v31, %v212
    %v214 = vpop.f32.mrf.mxu0
    %215 = vmatprep.mubr.f32.mxu0 0.0
    %216 = vmatmul.mubr.f32.gmra.mxu0 %v130
    %v217 = vpop.f32.mrf.mxu0
    %v218 = vadd.f32 %v31, %v217
    %v219 = vpop.f32.mrf.mxu0
    %220 = vdwg.mxu0
    %v221 = vmax.f32 %v203, 0.0
    %v222 = vmax.f32 %v208, 0.0
    %v223 = vmax.f32 %v213, 0.0
    %v224 = vmax.f32 %v218, 0.0
    %v225 = vld [vmem:[#allocation2 + $0x20] sm:$0xff]
    %v226 = vld [vmem:[#allocation2 + $0x30] sm:$0xff]
    %v227 = vld [vmem:[#allocation2 + $0x40] sm:$0xff]
    %v228 = vld [vmem:[#allocation2 + $0x50] sm:$0xff]
    %v229 = vld [vmem:[#allocation2 + $0x60] ss:$0 sm:$0xff]
    %v232 = vrot.slane %v221, 1
    %v233 = vrot.slane %v222, 1
    %v234 = vsel %vm34, %v232, %v233
    %235 = vrot.lane.b32.xlu0 %v234, 8
    %v236 = vpop.permute.xlu0 %235
    %237 = vrot.lane.b32.xlu0 %v233, 8
    %v238 = vpop.permute.xlu0 %237
    %v241 = vrot.slane %v221, 2
    %v242 = vrot.slane %v222, 2
    %v243 = vsel %vm44, %v241, %v242
    %244 = vrot.lane.b32.xlu0 %v243, 16
    %v245 = vpop.permute.xlu0 %244
    %246 = vrot.lane.b32.xlu0 %v242, 16
    %v247 = vpop.permute.xlu0 %246
    %v250 = vrot.slane %v221, 3
    %v251 = vrot.slane %v222, 3
    %v252 = vsel %vm55, %v250, %v251
    %253 = vrot.lane.b32.xlu0 %v252, 24
    %v254 = vpop.permute.xlu0 %253
    %255 = vrot.lane.b32.xlu0 %v251, 24
    %v256 = vpop.permute.xlu0 %255
    %vm259 = vcmask 64512
    %v260 = vsel %vm259, %v221, %v236
    %v261 = vsel %vm259, %v222, %v238
    %vm262 = vcmask 130048
    %v263 = vsel %vm262, %v260, %v245
    %v264 = vsel %vm262, %v261, %v247
    %vm265 = vcmask 195584
    %v266 = vsel %vm265, %v263, %v254
    %v267 = vsel %vm265, %v264, %v256
    %v270 = vrot.slane %v223, 1
    %v271 = vsel %vm34, %v233, %v270
    %v272 = vrot.slane %v224, 1
    %v273 = vsel %vm34, %v270, %v272
    %274 = vrot.lane.b32.xlu0 %v271, 8
    %v275 = vpop.permute.xlu0 %274
    %276 = vrot.lane.b32.xlu0 %v273, 8
    %v277 = vpop.permute.xlu0 %276
    %278 = vrot.lane.b32.xlu0 %v272, 8
    %v279 = vpop.permute.xlu0 %278
    %v283 = vrot.slane %v223, 2
    %v284 = vrot.slane %v224, 2
    %v285 = vsel %vm44, %v283, %v284
    %286 = vrot.lane.b32.xlu0 %v283, 16
    %v287 = vpop.permute.xlu0 %286
    %288 = vrot.lane.b32.xlu0 %v285, 16
    %v289 = vpop.permute.xlu0 %288
    %290 = vrot.lane.b32.xlu0 %v284, 16
    %v291 = vpop.permute.xlu0 %290
    %v295 = vrot.slane %v223, 3
    %v296 = vrot.slane %v224, 3
    %v297 = vsel %vm55, %v295, %v296
    %298 = vrot.lane.b32.xlu0 %v295, 24
    %v299 = vpop.permute.xlu0 %298
    %300 = vrot.lane.b32.xlu0 %v297, 24
    %v301 = vpop.permute.xlu0 %300
    %302 = vrot.lane.b32.xlu0 %v296, 24
    %v303 = vpop.permute.xlu0 %302
    %v307 = vsel %vm259, %v222, %v275
    %v308 = vsel %vm259, %v223, %v277
    %v309 = vsel %vm259, %v224, %v279
    %v310 = vsel %vm262, %v307, %v287
    %v311 = vsel %vm262, %v308, %v289
    %v312 = vsel %vm262, %v309, %v291
    %v313 = vsel %vm265, %v310, %v299
    %v314 = vsel %vm265, %v311, %v301
    %v315 = vsel %vm265, %v312, %v303
    %v319 = vrot.slane %v313, 3
    %v320 = vrot.slane %v314, 3
    %v321 = vsel %vm55, %v319, %v320
    %v322 = vrot.slane %v315, 3
    %v323 = vsel %vm55, %v320, %v322
    %vm325 = vcmask 1042432
    %v326 = vsel %vm325, %v267, %v321
    %vm327 = vcmask 261120
    %v329 = vsel %vm327, %v266, 0
    %v332 = vsel %vm327, %v326, 0
    %v334 = vsel %vm327, %v323, 0
    %336 = vmatprep.subr.mxu0 0.0
    %337 = vmatpush1.msra.mxu0 0.0
    %338 = vmatprep.subr.mxu0 0.0
    %339 = vmatpush1.msra.mxu0 0.0
    %340 = vmatprep.subr.mxu0 0.0
    %341 = vmatpush1.msra.mxu0 0.0
    %342 = vmatprep.subr.mxu0 0.0
    %343 = vmatpush1.msra.mxu0 0.0
    %344 = vmatprep.subr.mxu0 0.0
    %345 = vmatpush1.msra.mxu0 0.0
    %346 = vmatprep.subr.mxu0 0.0
    %347 = vmatpush1.msra.mxu0 0.0
    %348 = vmatprep.subr.mxu0 0.0
    %349 = vmatpush1.msra.mxu0 0.0
    %350 = vmatprep.subr.mxu0 0.0
    %351 = vmatpush1.msra.mxu0 0.0
    %352 = vmatprep.subr.mxu0 0.0
    %353 = vmatpush1.msra.mxu0 0.0
    %354 = vmatprep.subr.mxu0 0.0
    %355 = vmatpush1.msra.mxu0 0.0
    %356 = vmatprep.subr.mxu0 0.0
    %357 = vmatpush1.msra.mxu0 0.0
    %358 = vmatprep.subr.mxu0 0.0
    %359 = vmatpush1.msra.mxu0 0.0
    %360 = vmatprep.subr.mxu0 0.0
    %361 = vmatpush1.msra.mxu0 %v228
    %362 = vmatprep.subr.mxu0 0.0
    %363 = vmatpush1.msra.mxu0 %v227
    %364 = vmatprep.subr.mxu0 0.0
    %365 = vmatpush1.msra.mxu0 %v226
    %366 = vmatprep.subr.mxu0 0.0
    %367 = vmatpush1.msra.mxu0 %v225
    %368 = vmatprep.subr.mxu0 0.0
    %369 = vmatpush2.msra.mxu0 0.0
    %370 = vmatprep.subr.mxu0 0.0
    %371 = vmatpush2.msra.mxu0 0.0
    %372 = vmatprep.subr.mxu0 0.0
    %373 = vmatpush2.msra.mxu0 0.0
    %374 = vmatprep.subr.mxu0 0.0
    %375 = vmatpush2.msra.mxu0 0.0
    %376 = vmatprep.subr.mxu0 0.0
    %377 = vmatpush2.msra.mxu0 0.0
    %378 = vmatprep.subr.mxu0 0.0
    %379 = vmatpush2.msra.mxu0 0.0
    %380 = vmatprep.subr.mxu0 0.0
    %381 = vmatpush2.msra.mxu0 0.0
    %382 = vmatprep.subr.mxu0 0.0
    %383 = vmatpush2.msra.mxu0 0.0
    %384 = vmatprep.subr.mxu0 0.0
    %385 = vmatpush2.msra.mxu0 0.0
    %386 = vmatprep.subr.mxu0 0.0
    %387 = vmatpush2.msra.mxu0 0.0
    %388 = vmatprep.subr.mxu0 0.0
    %389 = vmatpush2.msra.mxu0 0.0
    %390 = vmatprep.subr.mxu0 0.0
    %391 = vmatpush2.msra.mxu0 0.0
    %392 = vmatprep.subr.mxu0 0.0
    %393 = vmatpush2.msra.mxu0 0.0
    %394 = vmatprep.subr.mxu0 0.0
    %395 = vmatpush2.msra.mxu0 0.0
    %396 = vmatprep.subr.mxu0 0.0
    %397 = vmatpush2.msra.mxu0 0.0
    %398 = vmatprep.subr.mxu0 0.0
    %399 = vmatpush2.msra.mxu0 0.0
    %400 = vmatprep.mubr.f32.mxu0 0.0
    %401 = vmatmul.mubr.f32.gmra.mxu0 %v329
    %v402 = vpop.f32.mrf.mxu0
    %v403 = vadd.f32 %v229, %v402
    %v404 = vpop.f32.mrf.mxu0
    %405 = vmatprep.mubr.f32.mxu0 0.0
    %406 = vmatmul.mubr.f32.gmra.mxu0 %v332
    %v407 = vpop.f32.mrf.mxu0
    %v408 = vadd.f32 %v229, %v407
    %v409 = vpop.f32.mrf.mxu0
    %410 = vmatprep.mubr.f32.mxu0 0.0
    %411 = vmatmul.mubr.f32.gmra.mxu0 %v334
    %v412 = vpop.f32.mrf.mxu0
    %v413 = vadd.f32 %v229, %v412
    %v414 = vpop.f32.mrf.mxu0
    %415 = vdwg.mxu0
    %v416 = vmax.f32 %v403, 0.0
    %v417 = vmax.f32 %v408, 0.0
    %v418 = vmax.f32 %v413, 0.0
    %v419 = vld [vmem:[#allocation2 + $0x70] sm:$0xff]
    %v420 = vld [vmem:[#allocation2 + $0x80] sm:$0xff]
    %v421 = vld [vmem:[#allocation2 + $0x90] sm:$0xff]
    %v422 = vld [vmem:[#allocation2 + $0xa0] sm:$0xff]
    %v423 = vld [vmem:[#allocation2 + $0xb0] sm:$0xff]
    %v424 = vld [vmem:[#allocation2 + $0xc0] sm:$0xff]
    %v425 = vld [vmem:[#allocation2 + $0xd0] sm:$0xff]
    %v426 = vld [vmem:[#allocation2 + $0xe0] sm:$0xff]
    %v427 = vld [vmem:[#allocation2 + $0xf0] ss:$0 sm:$0xff]
    %v430 = vrot.slane %v416, 1
    %v431 = vrot.slane %v417, 1
    %v432 = vsel %vm34, %v430, %v431
    %433 = vrot.lane.b32.xlu0 %v432, 16
    %v434 = vpop.permute.xlu0 %433
    %v436 = vrot.slane %v416, 2
    %v437 = vrot.slane %v417, 2
    %v438 = vsel %vm44, %v436, %v437
    %439 = vrot.lane.b32.xlu0 %v438, 32
    %v440 = vpop.permute.xlu0 %439
    %v442 = vrot.slane %v416, 3
    %v443 = vrot.slane %v417, 3
    %v444 = vsel %vm55, %v442, %v443
    %445 = vrot.lane.b32.xlu0 %v444, 48
    %v446 = vpop.permute.xlu0 %445
    %v448 = vsel %vm262, %v416, %v434
    %v449 = vsel %vm327, %v448, %v440
    %vm450 = vcmask 392192
    %v451 = vsel %vm450, %v449, %v446
    %v453 = vrot.slane %v418, 1
    %v454 = vsel %vm34, %v431, %v453
    %455 = vrot.lane.b32.xlu0 %v454, 16
    %v456 = vpop.permute.xlu0 %455
    %457 = vrot.lane.b32.xlu0 %v453, 16
    %v458 = vpop.permute.xlu0 %457
    %v461 = vrot.slane %v418, 2
    %v462 = vsel %vm44, %v437, %v461
    %463 = vrot.lane.b32.xlu0 %v462, 32
    %v464 = vpop.permute.xlu0 %463
    %465 = vrot.lane.b32.xlu0 %v461, 32
    %v466 = vpop.permute.xlu0 %465
    %v469 = vrot.slane %v418, 3
    %v470 = vsel %vm55, %v443, %v469
    %471 = vrot.lane.b32.xlu0 %v470, 48
    %v472 = vpop.permute.xlu0 %471
    %473 = vrot.lane.b32.xlu0 %v469, 48
    %v474 = vpop.permute.xlu0 %473
    %v477 = vsel %vm262, %v417, %v456
    %v478 = vsel %vm262, %v418, %v458
    %v479 = vsel %vm327, %v477, %v464
    %v480 = vsel %vm327, %v478, %v466
    %v481 = vsel %vm450, %v479, %v472
    %v482 = vsel %vm450, %v480, %v474
    %v485 = vrot.slane %v481, 3
    %v486 = vrot.slane %v482, 3
    %v487 = vsel %vm55, %v485, %v486
    %vm488 = vcmask 523264
    %v490 = vsel %vm488, %v451, 0
    %v492 = vsel %vm488, %v487, 0
    %494 = vmatprep.subr.mxu0 0.0
    %495 = vmatpush1.msra.mxu0 0.0
    %496 = vmatprep.subr.mxu0 0.0
    %497 = vmatpush1.msra.mxu0 0.0
    %498 = vmatprep.subr.mxu0 0.0
    %499 = vmatpush1.msra.mxu0 0.0
    %500 = vmatprep.subr.mxu0 0.0
    %501 = vmatpush1.msra.mxu0 0.0
    %502 = vmatprep.subr.mxu0 0.0
    %503 = vmatpush1.msra.mxu0 0.0
    %504 = vmatprep.subr.mxu0 0.0
    %505 = vmatpush1.msra.mxu0 0.0
    %506 = vmatprep.subr.mxu0 0.0
    %507 = vmatpush1.msra.mxu0 0.0
    %508 = vmatprep.subr.mxu0 0.0
    %509 = vmatpush1.msra.mxu0 0.0
    %510 = vmatprep.subr.mxu0 0.0
    %511 = vmatpush1.msra.mxu0 %v426
    %512 = vmatprep.subr.mxu0 0.0
    %513 = vmatpush1.msra.mxu0 %v425
    %514 = vmatprep.subr.mxu0 0.0
    %515 = vmatpush1.msra.mxu0 %v424
    %516 = vmatprep.subr.mxu0 0.0
    %517 = vmatpush1.msra.mxu0 %v423
    %518 = vmatprep.subr.mxu0 0.0
    %519 = vmatpush1.msra.mxu0 %v422
    %520 = vmatprep.subr.mxu0 0.0
    %521 = vmatpush1.msra.mxu0 %v421
    %522 = vmatprep.subr.mxu0 0.0
    %523 = vmatpush1.msra.mxu0 %v420
    %524 = vmatprep.subr.mxu0 0.0
    %525 = vmatpush1.msra.mxu0 %v419
    %526 = vmatprep.subr.mxu0 0.0
    %527 = vmatpush2.msra.mxu0 0.0
    %528 = vmatprep.subr.mxu0 0.0
    %529 = vmatpush2.msra.mxu0 0.0
    %530 = vmatprep.subr.mxu0 0.0
    %531 = vmatpush2.msra.mxu0 0.0
    %532 = vmatprep.subr.mxu0 0.0
    %533 = vmatpush2.msra.mxu0 0.0
    %534 = vmatprep.subr.mxu0 0.0
    %535 = vmatpush2.msra.mxu0 0.0
    %536 = vmatprep.subr.mxu0 0.0
    %537 = vmatpush2.msra.mxu0 0.0
    %538 = vmatprep.subr.mxu0 0.0
    %539 = vmatpush2.msra.mxu0 0.0
    %540 = vmatprep.subr.mxu0 0.0
    %541 = vmatpush2.msra.mxu0 0.0
    %542 = vmatprep.subr.mxu0 0.0
    %543 = vmatpush2.msra.mxu0 0.0
    %544 = vmatprep.subr.mxu0 0.0
    %545 = vmatpush2.msra.mxu0 0.0
    %546 = vmatprep.subr.mxu0 0.0
    %547 = vmatpush2.msra.mxu0 0.0
    %548 = vmatprep.subr.mxu0 0.0
    %549 = vmatpush2.msra.mxu0 0.0
    %550 = vmatprep.subr.mxu0 0.0
    %551 = vmatpush2.msra.mxu0 0.0
    %552 = vmatprep.subr.mxu0 0.0
    %553 = vmatpush2.msra.mxu0 0.0
    %554 = vmatprep.subr.mxu0 0.0
    %555 = vmatpush2.msra.mxu0 0.0
    %556 = vmatprep.subr.mxu0 0.0
    %557 = vmatpush2.msra.mxu0 0.0
    %558 = vmatprep.mubr.f32.mxu0 0.0
    %559 = vmatmul.mubr.f32.gmra.mxu0 %v490
    %v560 = vpop.f32.mrf.mxu0
    %v561 = vadd.f32 %v427, %v560
    %v562 = vpop.f32.mrf.mxu0
    %563 = vmatprep.mubr.f32.mxu0 0.0
    %564 = vmatmul.mubr.f32.gmra.mxu0 %v492
    %v565 = vpop.f32.mrf.mxu0
    %v566 = vadd.f32 %v427, %v565
    %v567 = vpop.f32.mrf.mxu0
    %568 = vdwg.mxu0
    %v569 = vmax.f32 %v561, 0.0
    %v570 = vmax.f32 %v566, 0.0
    %v571 = vld [vmem:[#allocation2 + $0x100] sm:$0xff]
    %v572 = vld [vmem:[#allocation2 + $0x110] sm:$0xff]
    %v573 = vld [vmem:[#allocation2 + $0x120] sm:$0xff]
    %v574 = vld [vmem:[#allocation2 + $0x130] sm:$0xff]
    %v575 = vld [vmem:[#allocation2 + $0x140] sm:$0xff]
    %v576 = vld [vmem:[#allocation2 + $0x150] sm:$0xff]
    %v577 = vld [vmem:[#allocation2 + $0x160] sm:$0xff]
    %v578 = vld [vmem:[#allocation2 + $0x170] sm:$0xff]
    %v579 = vld [vmem:[#allocation2 + $0x180] ss:$0 sm:$0xff]
    %v581 = vrot.slane %v569, 1
    %582 = vrot.lane.b32.xlu0 %v581, 16
    %v583 = vpop.permute.xlu0 %582
    %v585 = vrot.slane %v569, 2
    %586 = vrot.lane.b32.xlu0 %v585, 32
    %v587 = vpop.permute.xlu0 %586
    %v589 = vrot.slane %v569, 3
    %590 = vrot.lane.b32.xlu0 %v589, 48
    %v591 = vpop.permute.xlu0 %590
    %v593 = vsel %vm262, %v569, %v583
    %v594 = vsel %vm327, %v593, %v587
    %v595 = vsel %vm450, %v594, %v591
    %v597 = vrot.slane %v570, 1
    %598 = vrot.lane.b32.xlu0 %v597, 16
    %v599 = vpop.permute.xlu0 %598
    %v601 = vrot.slane %v570, 2
    %602 = vrot.lane.b32.xlu0 %v601, 32
    %v603 = vpop.permute.xlu0 %602
    %v605 = vrot.slane %v570, 3
    %606 = vrot.lane.b32.xlu0 %v605, 48
    %v607 = vpop.permute.xlu0 %606
    %v609 = vsel %vm262, %v570, %v599
    %v610 = vsel %vm327, %v609, %v603
    %v611 = vsel %vm450, %v610, %v607
    %v613 = vrot.slane %v611, 3
    %v615 = vsel %vm55, %v595, %v613
    %v617 = vsel %vm488, %v615, 0
    %v619 = vsel %vm488, %v613, 0
    %621 = vmatprep.subr.mxu0 0.0
    %622 = vmatpush1.msra.mxu0 0.0
    %623 = vmatprep.subr.mxu0 0.0
    %624 = vmatpush1.msra.mxu0 0.0
    %625 = vmatprep.subr.mxu0 0.0
    %626 = vmatpush1.msra.mxu0 0.0
    %627 = vmatprep.subr.mxu0 0.0
    %628 = vmatpush1.msra.mxu0 0.0
    %629 = vmatprep.subr.mxu0 0.0
    %630 = vmatpush1.msra.mxu0 0.0
    %631 = vmatprep.subr.mxu0 0.0
    %632 = vmatpush1.msra.mxu0 0.0
    %633 = vmatprep.subr.mxu0 0.0
    %634 = vmatpush1.msra.mxu0 0.0
    %635 = vmatprep.subr.mxu0 0.0
    %636 = vmatpush1.msra.mxu0 0.0
    %637 = vmatprep.subr.mxu0 0.0
    %638 = vmatpush1.msra.mxu0 %v578
    %639 = vmatprep.subr.mxu0 0.0
    %640 = vmatpush1.msra.mxu0 %v577
    %641 = vmatprep.subr.mxu0 0.0
    %642 = vmatpush1.msra.mxu0 %v576
    %643 = vmatprep.subr.mxu0 0.0
    %644 = vmatpush1.msra.mxu0 %v575
    %645 = vmatprep.subr.mxu0 0.0
    %646 = vmatpush1.msra.mxu0 %v574
    %647 = vmatprep.subr.mxu0 0.0
    %648 = vmatpush1.msra.mxu0 %v573
    %649 = vmatprep.subr.mxu0 0.0
    %650 = vmatpush1.msra.mxu0 %v572
    %651 = vmatprep.subr.mxu0 0.0
    %652 = vmatpush1.msra.mxu0 %v571
    %653 = vmatprep.subr.mxu0 0.0
    %654 = vmatpush2.msra.mxu0 0.0
    %655 = vmatprep.subr.mxu0 0.0
    %656 = vmatpush2.msra.mxu0 0.0
    %657 = vmatprep.subr.mxu0 0.0
    %658 = vmatpush2.msra.mxu0 0.0
    %659 = vmatprep.subr.mxu0 0.0
    %660 = vmatpush2.msra.mxu0 0.0
    %661 = vmatprep.subr.mxu0 0.0
    %662 = vmatpush2.msra.mxu0 0.0
    %663 = vmatprep.subr.mxu0 0.0
    %664 = vmatpush2.msra.mxu0 0.0
    %665 = vmatprep.subr.mxu0 0.0
    %666 = vmatpush2.msra.mxu0 0.0
    %667 = vmatprep.subr.mxu0 0.0
    %668 = vmatpush2.msra.mxu0 0.0
    %669 = vmatprep.subr.mxu0 0.0
    %670 = vmatpush2.msra.mxu0 0.0
    %671 = vmatprep.subr.mxu0 0.0
    %672 = vmatpush2.msra.mxu0 0.0
    %673 = vmatprep.subr.mxu0 0.0
    %674 = vmatpush2.msra.mxu0 0.0
    %675 = vmatprep.subr.mxu0 0.0
    %676 = vmatpush2.msra.mxu0 0.0
    %677 = vmatprep.subr.mxu0 0.0
    %678 = vmatpush2.msra.mxu0 0.0
    %679 = vmatprep.subr.mxu0 0.0
    %680 = vmatpush2.msra.mxu0 0.0
    %681 = vmatprep.subr.mxu0 0.0
    %682 = vmatpush2.msra.mxu0 0.0
    %683 = vmatprep.subr.mxu0 0.0
    %684 = vmatpush2.msra.mxu0 0.0
    %685 = vmatprep.mubr.f32.mxu0 0.0
    %686 = vmatmul.mubr.f32.gmra.mxu0 %v617
    %v687 = vpop.f32.mrf.mxu0
    %v688 = vadd.f32 %v579, %v687
    %v689 = vpop.f32.mrf.mxu0
    %690 = vmatprep.mubr.f32.mxu0 0.0
    %691 = vmatmul.mubr.f32.gmra.mxu0 %v619
    %v692 = vpop.f32.mrf.mxu0
    %v693 = vadd.f32 %v579, %v692
    %v694 = vpop.f32.mrf.mxu0
    %695 = vdwg.mxu0
    %v696 = vmax.f32 %v688, 0.0
    %v697 = vmax.f32 %v693, 0.0
    %v698 = vld [vmem:[#allocation2 + $0x190] sm:$0xff]
    %v699 = vld [vmem:[#allocation2 + $0x1a0] sm:$0xff]
    %v700 = vld [vmem:[#allocation2 + $0x1b0] sm:$0xff]
    %v701 = vld [vmem:[#allocation2 + $0x1c0] sm:$0xff]
    %v702 = vld [vmem:[#allocation2 + $0x1d0] sm:$0xff]
    %v703 = vld [vmem:[#allocation2 + $0x1e0] sm:$0xff]
    %v704 = vld [vmem:[#allocation2 + $0x1f0] sm:$0xff]
    %v705 = vld [vmem:[#allocation2 + $0x200] sm:$0xff]
    %v706 = vld [vmem:[#allocation2 + $0x210] ss:$0 sm:$0xff]
    %v708 = vrot.slane %v696, 1
    %709 = vrot.lane.b32.xlu0 %v708, 16
    %v710 = vpop.permute.xlu0 %709
    %v712 = vrot.slane %v696, 2
    %713 = vrot.lane.b32.xlu0 %v712, 32
    %v714 = vpop.permute.xlu0 %713
    %v716 = vrot.slane %v696, 3
    %717 = vrot.lane.b32.xlu0 %v716, 48
    %v718 = vpop.permute.xlu0 %717
    %v720 = vsel %vm262, %v696, %v710
    %v721 = vsel %vm327, %v720, %v714
    %v722 = vsel %vm450, %v721, %v718
    %v724 = vrot.slane %v697, 2
    %v725 = vsel %vm44, %v712, %v724
    %726 = vrot.lane.b32.xlu0 %v725, 32
    %v727 = vpop.permute.xlu0 %726
    %v729 = vrot.slane %v697, 3
    %730 = vrot.lane.b32.xlu0 %v729, 48
    %v731 = vpop.permute.xlu0 %730
    %v733 = vsel %vm327, %v720, %v727
    %v734 = vsel %vm450, %v733, %v731
    %v736 = vrot.slane %v734, 3
    %vm738 = vcmask 1041408
    %v739 = vsel %vm738, %v722, %v736
    %v741 = vsel %vm488, %v739, 0
    %743 = vmatprep.subr.mxu0 0.0
    %744 = vmatpush1.msra.mxu0 0.0
    %745 = vmatprep.subr.mxu0 0.0
    %746 = vmatpush1.msra.mxu0 0.0
    %747 = vmatprep.subr.mxu0 0.0
    %748 = vmatpush1.msra.mxu0 0.0
    %749 = vmatprep.subr.mxu0 0.0
    %750 = vmatpush1.msra.mxu0 0.0
    %751 = vmatprep.subr.mxu0 0.0
    %752 = vmatpush1.msra.mxu0 0.0
    %753 = vmatprep.subr.mxu0 0.0
    %754 = vmatpush1.msra.mxu0 0.0
    %755 = vmatprep.subr.mxu0 0.0
    %756 = vmatpush1.msra.mxu0 0.0
    %757 = vmatprep.subr.mxu0 0.0
    %758 = vmatpush1.msra.mxu0 0.0
    %759 = vmatprep.subr.mxu0 0.0
    %760 = vmatpush1.msra.mxu0 %v705
    %761 = vmatprep.subr.mxu0 0.0
    %762 = vmatpush1.msra.mxu0 %v704
    %763 = vmatprep.subr.mxu0 0.0
    %764 = vmatpush1.msra.mxu0 %v703
    %765 = vmatprep.subr.mxu0 0.0
    %766 = vmatpush1.msra.mxu0 %v702
    %767 = vmatprep.subr.mxu0 0.0
    %768 = vmatpush1.msra.mxu0 %v701
    %769 = vmatprep.subr.mxu0 0.0
    %770 = vmatpush1.msra.mxu0 %v700
    %771 = vmatprep.subr.mxu0 0.0
    %772 = vmatpush1.msra.mxu0 %v699
    %773 = vmatprep.subr.mxu0 0.0
    %774 = vmatpush1.msra.mxu0 %v698
    %775 = vmatprep.subr.mxu0 0.0
    %776 = vmatpush2.msra.mxu0 0.0
    %777 = vmatprep.subr.mxu0 0.0
    %778 = vmatpush2.msra.mxu0 0.0
    %779 = vmatprep.subr.mxu0 0.0
    %780 = vmatpush2.msra.mxu0 0.0
    %781 = vmatprep.subr.mxu0 0.0
    %782 = vmatpush2.msra.mxu0 0.0
    %783 = vmatprep.subr.mxu0 0.0
    %784 = vmatpush2.msra.mxu0 0.0
    %785 = vmatprep.subr.mxu0 0.0
    %786 = vmatpush2.msra.mxu0 0.0
    %787 = vmatprep.subr.mxu0 0.0
    %788 = vmatpush2.msra.mxu0 0.0
    %789 = vmatprep.subr.mxu0 0.0
    %790 = vmatpush2.msra.mxu0 0.0
    %791 = vmatprep.subr.mxu0 0.0
    %792 = vmatpush2.msra.mxu0 0.0
    %793 = vmatprep.subr.mxu0 0.0
    %794 = vmatpush2.msra.mxu0 0.0
    %795 = vmatprep.subr.mxu0 0.0
    %796 = vmatpush2.msra.mxu0 0.0
    %797 = vmatprep.subr.mxu0 0.0
    %798 = vmatpush2.msra.mxu0 0.0
    %799 = vmatprep.subr.mxu0 0.0
    %800 = vmatpush2.msra.mxu0 0.0
    %801 = vmatprep.subr.mxu0 0.0
    %802 = vmatpush2.msra.mxu0 0.0
    %803 = vmatprep.subr.mxu0 0.0
    %804 = vmatpush2.msra.mxu0 0.0
    %805 = vmatprep.subr.mxu0 0.0
    %806 = vmatpush2.msra.mxu0 0.0
    %807 = vmatprep.mubr.f32.mxu0 0.0
    %808 = vmatmul.mubr.f32.gmra.mxu0 %v741
    %v809 = vpop.f32.mrf.mxu0
    %v810 = vadd.f32 %v706, %v809
    %v811 = vpop.f32.mrf.mxu0
    %812 = vdwg.mxu0
    %v813 = vmax.f32 %v810, 0.0
    %v815 = vrot.slane %v813, 1
    %816 = vrot.lane.b32.xlu0 %v815, 16
    %v817 = vpop.permute.xlu0 %816
    %v819 = vsel %vm262, %v813, %v817
    %v821 = vrot.slane %v819, 1
    %vm823 = vcmask 1040384
    %v824 = vsel %vm823, %v819, %v821
    %v825 = vld [vmem:[#allocation2 + $0x220] sm:$0xff]
    %v826 = vld [vmem:[#allocation2 + $0x228] sm:$0xff]
    %v827 = vld [vmem:[#allocation2 + $0x230] sm:$0xff]
    %v828 = vld [vmem:[#allocation2 + $0x238] sm:$0xff]
    %v829 = vld [vmem:[#allocation2 + $0x240] sm:$0xff]
    %v830 = vld [vmem:[#allocation2 + $0x248] sm:$0xff]
    %v831 = vld [vmem:[#allocation2 + $0x250] sm:$0xff]
    %v832 = vld [vmem:[#allocation2 + $0x258] sm:$0xff]
    %s833 = scalar_lea.vmem [#allocation2], 608
    %v834 = vld [vmem:[%s833] ss:$8 sm:$0x3]
    %v836 = vlaneseq
    %v837 = vshrl.u32 %v836, 7
    %v838 = vsub.s32 0, %v837
    %v839 = vrot.slane %v834, %v838
    %v840 = vlaneseq
    %v841 = vshrl.u32 %v840, 7
    %v842 = vsub.s32 1, %v841
    %v843 = vrot.slane %v834, %v842
    %v847 = vsel %vm327, %v824, 0
    %849 = vmatprep.subr.mxu0 0.0
    %850 = vmatpush1.msra.mxu0 0.0
    %851 = vmatprep.subr.mxu0 0.0
    %852 = vmatpush1.msra.mxu0 0.0
    %853 = vmatprep.subr.mxu0 0.0
    %854 = vmatpush1.msra.mxu0 0.0
    %855 = vmatprep.subr.mxu0 0.0
    %856 = vmatpush1.msra.mxu0 0.0
    %857 = vmatprep.subr.mxu0 0.0
    %858 = vmatpush1.msra.mxu0 0.0
    %859 = vmatprep.subr.mxu0 0.0
    %860 = vmatpush1.msra.mxu0 0.0
    %861 = vmatprep.subr.mxu0 0.0
    %862 = vmatpush1.msra.mxu0 0.0
    %863 = vmatprep.subr.mxu0 0.0
    %864 = vmatpush1.msra.mxu0 0.0
    %865 = vmatprep.subr.mxu0 0.0
    %866 = vmatpush1.msra.mxu0 0.0
    %867 = vmatprep.subr.mxu0 0.0
    %868 = vmatpush1.msra.mxu0 0.0
    %869 = vmatprep.subr.mxu0 0.0
    %870 = vmatpush1.msra.mxu0 0.0
    %871 = vmatprep.subr.mxu0 0.0
    %872 = vmatpush1.msra.mxu0 0.0
    %873 = vmatprep.subr.mxu0 %v832
    %874 = vmatpush1.msra.mxu0 %v831
    %875 = vmatprep.subr.mxu0 %v830
    %876 = vmatpush1.msra.mxu0 %v829
    %877 = vmatprep.subr.mxu0 %v828
    %878 = vmatpush1.msra.mxu0 %v827
    %879 = vmatprep.subr.mxu0 %v826
    %880 = vmatpush1.msra.mxu0 %v825
    %881 = vmatprep.subr.mxu0 0.0
    %882 = vmatpush2.msra.mxu0 0.0
    %883 = vmatprep.subr.mxu0 0.0
    %884 = vmatpush2.msra.mxu0 0.0
    %885 = vmatprep.subr.mxu0 0.0
    %886 = vmatpush2.msra.mxu0 0.0
    %887 = vmatprep.subr.mxu0 0.0
    %888 = vmatpush2.msra.mxu0 0.0
    %889 = vmatprep.subr.mxu0 0.0
    %890 = vmatpush2.msra.mxu0 0.0
    %891 = vmatprep.subr.mxu0 0.0
    %892 = vmatpush2.msra.mxu0 0.0
    %893 = vmatprep.subr.mxu0 0.0
    %894 = vmatpush2.msra.mxu0 0.0
    %895 = vmatprep.subr.mxu0 0.0
    %896 = vmatpush2.msra.mxu0 0.0
    %897 = vmatprep.subr.mxu0 0.0
    %898 = vmatpush2.msra.mxu0 0.0
    %899 = vmatprep.subr.mxu0 0.0
    %900 = vmatpush2.msra.mxu0 0.0
    %901 = vmatprep.subr.mxu0 0.0
    %902 = vmatpush2.msra.mxu0 0.0
    %903 = vmatprep.subr.mxu0 0.0
    %904 = vmatpush2.msra.mxu0 0.0
    %905 = vmatprep.subr.mxu0 0.0
    %906 = vmatpush2.msra.mxu0 0.0
    %907 = vmatprep.subr.mxu0 0.0
    %908 = vmatpush2.msra.mxu0 0.0
    %909 = vmatprep.subr.mxu0 0.0
    %910 = vmatpush2.msra.mxu0 0.0
    %911 = vmatprep.subr.mxu0 0.0
    %912 = vmatpush2.msra.mxu0 0.0
    %913 = vmatprep.mubr.f32.mxu0 0.0
    %914 = vmatmul.mubr.f32.gmra.mxu0 %v847
    %v915 = vpop.f32.mrf.mxu0
    %v916 = vadd.f32 %v839, %v915
    %v917 = vpop.f32.mrf.mxu0
    %v918 = vadd.f32 %v843, %v917
    %919 = vdwg.mxu0
    %v920 = vmax.f32 %v916, 0.0
    %v921 = vmax.f32 %v918, 0.0
    %v922 = vld [vmem:[#allocation2 + $0x270] sm:$0xff]
    %v923 = vld [vmem:[#allocation2 + $0x280] sm:$0xff]
    %v924 = vld [vmem:[#allocation2 + $0x290] sm:$0xff]
    %v925 = vld [vmem:[#allocation2 + $0x2a0] sm:$0xff]
    %v926 = vld [vmem:[#allocation2 + $0x2b0] sm:$0xff]
    %v927 = vld [vmem:[#allocation2 + $0x2c0] sm:$0xff]
    %v928 = vld [vmem:[#allocation2 + $0x2d0] sm:$0xff]
    %v929 = vld [vmem:[#allocation2 + $0x2e0] sm:$0xff]
    %v930 = vld [vmem:[#allocation2 + $0x2f0] sm:$0xff]
    %v931 = vld [vmem:[#allocation2 + $0x300] sm:$0xff]
    %v932 = vld [vmem:[#allocation2 + $0x310] sm:$0xff]
    %v933 = vld [vmem:[#allocation2 + $0x320] sm:$0xff]
    %v934 = vld [vmem:[#allocation2 + $0x330] sm:$0xff]
    %v935 = vld [vmem:[#allocation2 + $0x340] sm:$0xff]
    %v936 = vld [vmem:[#allocation2 + $0x350] sm:$0xff]
    %v937 = vld [vmem:[#allocation2 + $0x360] sm:$0xff]
    %v938 = vld [vmem:[#allocation2 + $0x370] sm:$0xff]
    %v939 = vld [vmem:[#allocation2 + $0x380] sm:$0xff]
    %v940 = vld [vmem:[#allocation2 + $0x390] sm:$0xff]
    %v941 = vld [vmem:[#allocation2 + $0x3a0] sm:$0xff]
    %v942 = vld [vmem:[#allocation2 + $0x3b0] sm:$0xff]
    %v943 = vld [vmem:[#allocation2 + $0x3c0] sm:$0xff]
    %v944 = vld [vmem:[#allocation2 + $0x3d0] sm:$0xff]
    %v945 = vld [vmem:[#allocation2 + $0x3e0] sm:$0xff]
    %v946 = vld [vmem:[#allocation2 + $0x3f0] sm:$0xff]
    %v947 = vld [vmem:[#allocation2 + $0x400] sm:$0xff]
    %v948 = vld [vmem:[#allocation2 + $0x410] sm:$0xff]
    %v949 = vld [vmem:[#allocation2 + $0x420] sm:$0xff]
    %v950 = vld [vmem:[#allocation2 + $0x430] sm:$0xff]
    %v951 = vld [vmem:[#allocation2 + $0x440] sm:$0xff]
    %v952 = vld [vmem:[#allocation2 + $0x450] sm:$0xff]
    %v953 = vld [vmem:[#allocation2 + $0x460] sm:$0xff]
    %v954 = vld [vmem:[#allocation2 + $0x470] ss:$0 sm:$0xff]
    %955 = vmatprep.subr.mxu0 0.0
    %956 = vmatpush1.msra.mxu0 %v937
    %957 = vmatprep.subr.mxu0 0.0
    %958 = vmatpush1.msra.mxu0 %v936
    %959 = vmatprep.subr.mxu0 0.0
    %960 = vmatpush1.msra.mxu0 %v935
    %961 = vmatprep.subr.mxu0 0.0
    %962 = vmatpush1.msra.mxu0 %v934
    %963 = vmatprep.subr.mxu0 0.0
    %964 = vmatpush1.msra.mxu0 %v933
    %965 = vmatprep.subr.mxu0 0.0
    %966 = vmatpush1.msra.mxu0 %v932
    %967 = vmatprep.subr.mxu0 0.0
    %968 = vmatpush1.msra.mxu0 %v931
    %969 = vmatprep.subr.mxu0 0.0
    %970 = vmatpush1.msra.mxu0 %v930
    %971 = vmatprep.subr.mxu0 0.0
    %972 = vmatpush1.msra.mxu0 %v929
    %973 = vmatprep.subr.mxu0 0.0
    %974 = vmatpush1.msra.mxu0 %v928
    %975 = vmatprep.subr.mxu0 0.0
    %976 = vmatpush1.msra.mxu0 %v927
    %977 = vmatprep.subr.mxu0 0.0
    %978 = vmatpush1.msra.mxu0 %v926
    %979 = vmatprep.subr.mxu0 0.0
    %980 = vmatpush1.msra.mxu0 %v925
    %981 = vmatprep.subr.mxu0 0.0
    %982 = vmatpush1.msra.mxu0 %v924
    %983 = vmatprep.subr.mxu0 0.0
    %984 = vmatpush1.msra.mxu0 %v923
    %985 = vmatprep.subr.mxu0 0.0
    %986 = vmatpush1.msra.mxu0 %v922
    %987 = vmatprep.subr.mxu0 0.0
    %988 = vmatpush2.msra.mxu0 %v953
    %989 = vmatprep.subr.mxu0 0.0
    %990 = vmatpush2.msra.mxu0 %v952
    %991 = vmatprep.subr.mxu0 0.0
    %992 = vmatpush2.msra.mxu0 %v951
    %993 = vmatprep.subr.mxu0 0.0
    %994 = vmatpush2.msra.mxu0 %v950
    %995 = vmatprep.subr.mxu0 0.0
    %996 = vmatpush2.msra.mxu0 %v949
    %997 = vmatprep.subr.mxu0 0.0
    %998 = vmatpush2.msra.mxu0 %v948
    %999 = vmatprep.subr.mxu0 0.0
    %1000 = vmatpush2.msra.mxu0 %v947
    %1001 = vmatprep.subr.mxu0 0.0
    %1002 = vmatpush2.msra.mxu0 %v946
    %1003 = vmatprep.subr.mxu0 0.0
    %1004 = vmatpush2.msra.mxu0 %v945
    %1005 = vmatprep.subr.mxu0 0.0
    %1006 = vmatpush2.msra.mxu0 %v944
    %1007 = vmatprep.subr.mxu0 0.0
    %1008 = vmatpush2.msra.mxu0 %v943
    %1009 = vmatprep.subr.mxu0 0.0
    %1010 = vmatpush2.msra.mxu0 %v942
    %1011 = vmatprep.subr.mxu0 0.0
    %1012 = vmatpush2.msra.mxu0 %v941
    %1013 = vmatprep.subr.mxu0 0.0
    %1014 = vmatpush2.msra.mxu0 %v940
    %1015 = vmatprep.subr.mxu0 0.0
    %1016 = vmatpush2.msra.mxu0 %v939
    %1017 = vmatprep.subr.mxu0 0.0
    %1018 = vmatpush2.msra.mxu0 %v938
    %1019 = vmatprep.mubr.f32.mxu0 %v921
    %1020 = vmatmul.mubr.f32.gmra.mxu0 %v920
    %v1021 = vpop.f32.mrf.mxu0
    %v1022 = vadd.f32 %v954, %v1021
    %v1023 = vpop.f32.mrf.mxu0
    %1024 = vdwg.mxu0
    %v1025 = vmax.f32 %v1022, 0.0
    %v1026 = vld [vmem:[#allocation2 + $0x480] sm:$0xff]
    %v1027 = vld [vmem:[#allocation2 + $0x490] sm:$0xff]
    %v1028 = vld [vmem:[#allocation2 + $0x4a0] sm:$0xff]
    %v1029 = vld [vmem:[#allocation2 + $0x4b0] sm:$0xff]
    %v1030 = vld [vmem:[#allocation2 + $0x4c0] sm:$0xff]
    %v1031 = vld [vmem:[#allocation2 + $0x4d0] sm:$0xff]
    %v1032 = vld [vmem:[#allocation2 + $0x4e0] sm:$0xff]
    %v1033 = vld [vmem:[#allocation2 + $0x4f0] sm:$0xff]
    %v1034 = vld [vmem:[#allocation2 + $0x500] sm:$0xff]
    %v1035 = vld [vmem:[#allocation2 + $0x510] sm:$0xff]
    %v1036 = vld [vmem:[#allocation2 + $0x520] sm:$0xff]
    %v1037 = vld [vmem:[#allocation2 + $0x530] sm:$0xff]
    %v1038 = vld [vmem:[#allocation2 + $0x540] sm:$0xff]
    %v1039 = vld [vmem:[#allocation2 + $0x550] sm:$0xff]
    %v1040 = vld [vmem:[#allocation2 + $0x560] sm:$0xff]
    %v1041 = vld [vmem:[#allocation2 + $0x570] sm:$0xff]
    %v1042 = vld [vmem:[#allocation2 + $0x580] ss:$0 sm:$0xff]
    %1043 = vmatprep.subr.mxu0 0.0
    %1044 = vmatpush1.msra.mxu0 %v1041
    %1045 = vmatprep.subr.mxu0 0.0
    %1046 = vmatpush1.msra.mxu0 %v1040
    %1047 = vmatprep.subr.mxu0 0.0
    %1048 = vmatpush1.msra.mxu0 %v1039
    %1049 = vmatprep.subr.mxu0 0.0
    %1050 = vmatpush1.msra.mxu0 %v1038
    %1051 = vmatprep.subr.mxu0 0.0
    %1052 = vmatpush1.msra.mxu0 %v1037
    %1053 = vmatprep.subr.mxu0 0.0
    %1054 = vmatpush1.msra.mxu0 %v1036
    %1055 = vmatprep.subr.mxu0 0.0
    %1056 = vmatpush1.msra.mxu0 %v1035
    %1057 = vmatprep.subr.mxu0 0.0
    %1058 = vmatpush1.msra.mxu0 %v1034
    %1059 = vmatprep.subr.mxu0 0.0
    %1060 = vmatpush1.msra.mxu0 %v1033
    %1061 = vmatprep.subr.mxu0 0.0
    %1062 = vmatpush1.msra.mxu0 %v1032
    %1063 = vmatprep.subr.mxu0 0.0
    %1064 = vmatpush1.msra.mxu0 %v1031
    %1065 = vmatprep.subr.mxu0 0.0
    %1066 = vmatpush1.msra.mxu0 %v1030
    %1067 = vmatprep.subr.mxu0 0.0
    %1068 = vmatpush1.msra.mxu0 %v1029
    %1069 = vmatprep.subr.mxu0 0.0
    %1070 = vmatpush1.msra.mxu0 %v1028
    %1071 = vmatprep.subr.mxu0 0.0
    %1072 = vmatpush1.msra.mxu0 %v1027
    %1073 = vmatprep.subr.mxu0 0.0
    %1074 = vmatpush1.msra.mxu0 %v1026
    %1075 = vmatprep.subr.mxu0 0.0
    %1076 = vmatpush2.msra.mxu0 0.0
    %1077 = vmatprep.subr.mxu0 0.0
    %1078 = vmatpush2.msra.mxu0 0.0
    %1079 = vmatprep.subr.mxu0 0.0
    %1080 = vmatpush2.msra.mxu0 0.0
    %1081 = vmatprep.subr.mxu0 0.0
    %1082 = vmatpush2.msra.mxu0 0.0
    %1083 = vmatprep.subr.mxu0 0.0
    %1084 = vmatpush2.msra.mxu0 0.0
    %1085 = vmatprep.subr.mxu0 0.0
    %1086 = vmatpush2.msra.mxu0 0.0
    %1087 = vmatprep.subr.mxu0 0.0
    %1088 = vmatpush2.msra.mxu0 0.0
    %1089 = vmatprep.subr.mxu0 0.0
    %1090 = vmatpush2.msra.mxu0 0.0
    %1091 = vmatprep.subr.mxu0 0.0
    %1092 = vmatpush2.msra.mxu0 0.0
    %1093 = vmatprep.subr.mxu0 0.0
    %1094 = vmatpush2.msra.mxu0 0.0
    %1095 = vmatprep.subr.mxu0 0.0
    %1096 = vmatpush2.msra.mxu0 0.0
    %1097 = vmatprep.subr.mxu0 0.0
    %1098 = vmatpush2.msra.mxu0 0.0
    %1099 = vmatprep.subr.mxu0 0.0
    %1100 = vmatpush2.msra.mxu0 0.0
    %1101 = vmatprep.subr.mxu0 0.0
    %1102 = vmatpush2.msra.mxu0 0.0
    %1103 = vmatprep.subr.mxu0 0.0
    %1104 = vmatpush2.msra.mxu0 0.0
    %1105 = vmatprep.subr.mxu0 0.0
    %1106 = vmatpush2.msra.mxu0 0.0
    %1107 = vmatprep.mubr.f32.mxu0 0.0
    %1108 = vmatmul.mubr.f32.gmra.mxu0 %v1025
    %v1109 = vpop.f32.mrf.mxu0
    %v1110 = vadd.f32 %v1042, %v1109
    %v1111 = vpop.f32.mrf.mxu0
    %1112 = vdwg.mxu0
    %1113 = vst [vmem:[%s2] sm:$0x3] %v1110
    // Predicated region
    $region14: #{mid4conv_forward.1} parent=1 // pred_check
      _
    $region15: #{mid4conv_forward.1} parent=1 // pred_check_branch
      %1115 = sbr.rel (0) target = $region17
    $region16: #{mid4conv_forward.1} parent=1 // pred_region
      _
    $region17: #{mid4conv_forward.1} parent=1 // pred_fallthru
      _
    // Predicated region
    $region18: #{mid4conv_forward.1} parent=1 // pred_check
      _
    $region19: #{mid4conv_forward.1} parent=1 // pred_check_branch
      %1117 = sbr.rel (0) target = $region21
    $region20: #{mid4conv_forward.1} parent=1 // pred_region
      _
    $region21: #{mid4conv_forward.1} parent=1 // pred_fallthru
      _
    %1118 = vsyncpa [#allocation3], 1

</llo_original>
